<compile_context>
chip_gen: v7x
topology: tpu7x:2x2x1
jax: 0.10.0
libtpu: 0.0.40
codegen_flags: <defaults>
</compile_context>

<pallas_src>
import functools

import jax
import jax.numpy as jnp
from jax import lax
from jax.experimental import pallas as pl
from jax.experimental.pallas import tpu as pltpu

_LANE = 1024                           # lane width of the flatten fallback (multiple of 128)
_TARGET_TILE_BYTES = 4 * 1024 * 1024   # ~4 MiB per input per pipeline buffer
_MAX_DIRECT_COLS = 16384               # widest row we stream without column tiling
_VMEM_LIMIT_BYTES = 32 * 1024 * 1024   # <= default on v6e/v7x, raises v5e's 16 MiB default


def _round_up(x, m):
    return -(-x // m) * m


def _round_down(x, m):
    return (x // m) * m


def _l2_loss_kernel(out_ref, lab_ref, loss_ref, acc_ref, *,
                    n_valid_rows, inv_batch, need_mask):
    i = pl.program_id(0)
    tile_r, width = out_ref.shape

    @pl.when(i == 0)
    def _init():
        acc_ref[...] = jnp.zeros_like(acc_ref)

    d = out_ref[...].astype(jnp.float32) - lab_ref[...].astype(jnp.float32)
    sq = d * d

    if need_mask:
        # Only the last (overhanging) tile has rows past n_valid_rows; their
        # contents are undefined, so zero them before accumulating.  For all
        # other tiles the limit is >= tile_r and the select keeps everything.
        row_ids = lax.broadcasted_iota(jnp.int32, sq.shape, 0)
        limit = n_valid_rows - i * tile_r
        sq = jnp.where(row_ids < limit, sq, 0.0)

    # Fold the tile into an (8, width) running partial with pure VALU adds
    # (vreg-aligned reshape; no per-step cross-lane XLU reduction).
    acc_ref[...] += sq.reshape(tile_r // 8, 8, width).sum(axis=0)

    @pl.when(i == pl.num_programs(0) - 1)
    def _finalize():
        # Single cross-lane/sublane reduce + mean-over-batch, scalar to SMEM.
        loss_ref[0] = jnp.sum(acc_ref[...]) * jnp.float32(inv_batch)


def l2_loss(outputs: jax.Array, labels: jax.Array) -> jax.Array:
    """Pallas TPU implementation of L2_Loss.forward. Returns a float32 scalar."""
    assert outputs.shape == labels.shape
    assert outputs.ndim == 2 and outputs.shape[1] % 2 == 0
    batch, coords = outputs.shape

    itemsize = jnp.dtype(outputs.dtype).itemsize
    sub = max(8, 32 // itemsize)  # sublane multiple: 8 (f32), 16 (bf16), 32 (int8/fp8)

    if coords % 128 == 0 and coords <= _MAX_DIRECT_COLS and batch >= sub:
        # Fast path: already lane-dense -> stream the original arrays directly
        # (zero wrapper-side copies); ragged batch handled by in-kernel mask.
        o2, l2 = outputs, labels
    else:
        # Awkward width (typical small keypoint tensors): flatten and pad the
        # tail only up to the minimal sublane multiple of the lane width.
        # Zero padding on BOTH operands contributes exactly 0 to the sum.
        n = batch * coords
        padded = _round_up(n, sub * _LANE)

        def repack(x):
            x = x.reshape(-1)
            if padded != n:
                x = jnp.pad(x, (0, padded - n))
            return x.reshape(padded // _LANE, _LANE)

        o2, l2 = repack(outputs), repack(labels)

    rows, width = o2.shape
    target_rows = max(sub, _round_down(_TARGET_TILE_BYTES // (itemsize * width), sub))
    tile_r = min(target_rows, _round_down(rows, sub))
    num_tiles = pl.cdiv(rows, tile_r)
    need_mask = (rows % tile_r) != 0  # last tile overhangs -> mask required

    kernel = functools.partial(
        _l2_loss_kernel,
        n_valid_rows=rows,
        inv_batch=1.0 / batch,
        need_mask=need_mask,
    )

    loss = pl.pallas_call(
        kernel,
        out_shape=jax.ShapeDtypeStruct((1,), jnp.float32),
        grid_spec=pltpu.PrefetchScalarGridSpec(
            num_scalar_prefetch=0,
            grid=(num_tiles,),
            in_specs=[
                pl.BlockSpec((tile_r, width), lambda i: (i, 0)),
                pl.BlockSpec((tile_r, width), lambda i: (i, 0)),
            ],
            out_specs=pl.BlockSpec(memory_space=pltpu.MemorySpace.SMEM),
            scratch_shapes=[pltpu.VMEM((8, width), jnp.float32)],
        ),
        compiler_params=pltpu.CompilerParams(
            dimension_semantics=("arbitrary",),  # streaming reduction axis
            vmem_limit_bytes=_VMEM_LIMIT_BYTES,
        ),
    )(o2, l2)
    return loss[0]


def l2_loss_ref(outputs, labels):
    # Pure-JAX reference mirroring the PyTorch graph exactly (f32 compute).
    b, kp2 = outputs.shape
    k = kp2 // 2
    o = outputs.reshape(b * k, 2).astype(jnp.float32)
    l = labels.reshape(b * k, 2).astype(jnp.float32)
    per_kp = jnp.sum((o - l) ** 2, axis=1).reshape(b, k)
    return jnp.mean(jnp.sum(per_kp, axis=1))


if __name__ == "__main__":
    key = jax.random.PRNGKey(0)
    k1, k2, k3, k4, k5, k6 = jax.random.split(key, 6)

    # Small shape consistent with the module: batch=2, 8 keypoints -> 16 coords
    # (awkward width -> minimal flatten/pad fallback path).
    B, K = 2, 8
    outputs = jax.random.normal(k1, (B, 2 * K), dtype=jnp.float32)
    labels = jax.random.normal(k2, (B, 2 * K), dtype=jnp.float32)
    loss = jax.block_until_ready(l2_loss(outputs, labels))
    ref = jax.block_until_ready(l2_loss_ref(outputs, labels))
    assert jnp.allclose(loss, ref, rtol=1e-5, atol=1e-5), (loss, ref)

    # Lane-dense zero-copy path with a ragged (overhanging, masked) last tile:
    # 257 rows, 4096 coords -> tile_r=256, grid=2, last tile masked.
    B2, K2 = 257, 2048
    outputs2 = jax.random.normal(k3, (B2, 2 * K2), dtype=jnp.float32)
    labels2 = jax.random.normal(k4, (B2, 2 * K2), dtype=jnp.float32)
    loss2 = jax.block_until_ready(l2_loss(outputs2, labels2))
    ref2 = jax.block_until_ready(l2_loss_ref(outputs2, labels2))
    assert jnp.allclose(loss2, ref2, rtol=1e-4, atol=1e-4), (loss2, ref2)

    # bf16 inputs stream at half the HBM bytes; the diff is computed in f32
    # in-kernel, so it matches the f32 reference on the same bf16 values.
    B3, K3 = 64, 128
    outputs3 = jax.random.normal(k5, (B3, 2 * K3), dtype=jnp.bfloat16)
    labels3 = jax.random.normal(k6, (B3, 2 * K3), dtype=jnp.bfloat16)
    loss3 = jax.block_until_ready(l2_loss(outputs3, labels3))
    ref3 = jax.block_until_ready(l2_loss_ref(outputs3, labels3))
    assert jnp.allclose(loss3, ref3, rtol=1e-4, atol=1e-4), (loss3, ref3)

    print("KERNEL_OK")
</pallas_src>

<mosaic_0001>
module attributes {stable_mosaic.version = 11 : i64} {
  func.func @_l2_loss_kernel(%arg0: i32, %arg1: memref<8x1024xf32, #tpu.memory_space<vmem>>, %arg2: memref<8x1024xf32, #tpu.memory_space<vmem>>, %arg3: memref<1xf32, #tpu.memory_space<smem>>, %arg4: memref<8x1024xf32, #tpu.memory_space<vmem>>) attributes {dimension_semantics = [#tpu.dimension_semantics<arbitrary>], iteration_bounds = array<i64: 1>, scalar_prefetch = 0 : i64, scratch_operands = 1 : i64, tpu.core_type = #tpu.core_type<tc>, window_params = [{transform_indices = @transform_0, window_bounds = array<i64: 8, 1024>}, {transform_indices = @transform_1, window_bounds = array<i64: 8, 1024>}, {transform_indices = @transform_2, window_bounds = array<i64: 1>}]} {
    %c0_i32 = arith.constant 0 : i32
    %0 = arith.cmpi eq, %arg0, %c0_i32 : i32
    %1 = arith.extui %0 : i1 to i32
    %c0_i32_0 = arith.constant 0 : i32
    %2 = arith.cmpi ne, %1, %c0_i32_0 : i32
    scf.if %2 {
      %cst_10 = arith.constant 0.000000e+00 : f32
      %15 = vector.broadcast %cst_10 : f32 to vector<8x1024xf32>
      %c0_11 = arith.constant 0 : index
      %c0_12 = arith.constant 0 : index
      %16 = vector.load %arg4[%c0_11, %c0_12] : memref<8x1024xf32, #tpu.memory_space<vmem>>, vector<8x1024xf32>
      tpu.vector_store %arg4[%c0_11, %c0_12], %15 {strides = array<i32>} : memref<8x1024xf32, #tpu.memory_space<vmem>>, vector<8x1024xf32>,
    } else {
    }
    %c0 = arith.constant 0 : index
    %c0_1 = arith.constant 0 : index
    %3 = vector.load %arg1[%c0, %c0_1] : memref<8x1024xf32, #tpu.memory_space<vmem>>, vector<8x1024xf32>
    %c0_2 = arith.constant 0 : index
    %c0_3 = arith.constant 0 : index
    %4 = vector.load %arg2[%c0_2, %c0_3] : memref<8x1024xf32, #tpu.memory_space<vmem>>, vector<8x1024xf32>
    %5 = arith.subf %3, %4 : vector<8x1024xf32>
    %6 = arith.mulf %5, %5 : vector<8x1024xf32>
    %c0_4 = arith.constant 0 : index
    %c0_5 = arith.constant 0 : index
    %7 = vector.load %arg4[%c0_4, %c0_5] : memref<8x1024xf32, #tpu.memory_space<vmem>>, vector<8x1024xf32>
    %8 = vector.shape_cast %6 : vector<8x1024xf32> to vector<1x8x1024xf32>
    %cst = arith.constant dense<0.000000e+00> : vector<8x1024xf32>
    %9 = vector.multi_reduction <add>, %8, %cst [0] : vector<1x8x1024xf32> to vector<8x1024xf32>
    %10 = arith.addf %7, %9 : vector<8x1024xf32>
    %c0_6 = arith.constant 0 : index
    %c0_7 = arith.constant 0 : index
    %11 = vector.load %arg4[%c0_6, %c0_7] : memref<8x1024xf32, #tpu.memory_space<vmem>>, vector<8x1024xf32>
    tpu.vector_store %arg4[%c0_6, %c0_7], %10 {strides = array<i32>} : memref<8x1024xf32, #tpu.memory_space<vmem>>, vector<8x1024xf32>,
    %c0_i32_8 = arith.constant 0 : i32
    %12 = arith.cmpi eq, %arg0, %c0_i32_8 : i32
    %13 = arith.extui %12 : i1 to i32
    %c0_i32_9 = arith.constant 0 : i32
    %14 = arith.cmpi ne, %13, %c0_i32_9 : i32
    scf.if %14 {
      %c0_10 = arith.constant 0 : index
      %c0_11 = arith.constant 0 : index
      %15 = vector.load %arg4[%c0_10, %c0_11] : memref<8x1024xf32, #tpu.memory_space<vmem>>, vector<8x1024xf32>
      %16 = vector.shape_cast %15 : vector<8x1024xf32> to vector<1x8x1024xf32>
      %cst_12 = arith.constant dense<0.000000e+00> : vector<1xf32>
      %17 = vector.multi_reduction <add>, %16, %cst_12 [1, 2] : vector<1x8x1024xf32> to vector<1xf32>
      %18 = vector.shape_cast %17 : vector<1xf32> to vector<1x1x1xf32>
      %19 = vector.extract %18[0, 0, 0] : f32 from vector<1x1x1xf32>
      %cst_13 = arith.constant 5.000000e-01 : f32
      %20 = arith.mulf %19, %cst_13 : f32
      %c0_14 = arith.constant 0 : index
      %21 = memref.load %arg3[%c0_14] : memref<1xf32, #tpu.memory_space<smem>>
      memref.store %20, %arg3[%c0_14] : memref<1xf32, #tpu.memory_space<smem>>
    } else {
    }
    return
  }
  func.func @transform_0(%arg0: i32) -> (i32, i32) {
    %c0_i32 = arith.constant 0 : i32
    %c0_i32_0 = arith.constant 0 : i32
    return %arg0, %c0_i32 : i32, i32
  }
  func.func @transform_1(%arg0: i32) -> (i32, i32) {
    %c0_i32 = arith.constant 0 : i32
    %c0_i32_0 = arith.constant 0 : i32
    return %arg0, %c0_i32 : i32, i32
  }
  func.func @transform_2(%arg0: i32) -> i32 {
    %c0_i32 = arith.constant 0 : i32
    %c0_i32_0 = arith.constant 0 : i32
    return %c0_i32 : i32
  }
}

</mosaic_0001>

<llo_original>
// kernel: tpu_custom_call.1
$region0: #{tpu_custom_call.1}
  #allocation0 [shape = 'u32[]', space=smem, size = 0x4, offset = 0x4, fixed_abs, tag = 'smem constant byte address 0x4 - core index']
  #allocation1 [shape = 'u32[144,128]{1,0:T(1,128)}', space=vmem, size = 0x12000, scoped, tag = 'internal scratch']
  #allocation2 [shape = 'f32[8,1024]{1,0:T(8,128)}', space=vmem, size = 0x8000, scoped, tag = 'scratch operand']
  %s0 = inlined_call_operand.hbm [shape: f32[8,1024], index: 0, kind: input, shape index: {}]
  %s1 = inlined_call_operand.hbm [shape: f32[8,1024], index: 1, kind: input, shape index: {}]
  %s2 = inlined_call_operand.hbm [shape: f32[1], index: 2, kind: output, shape index: {}]
  %s3 = sld [smem:[#allocation0]]
  $region34: #{tpu_custom_call.1} parent=0
    _
  %s5 = ssub.s32 1, %s3
  %s6 = scalar_select 0, %s5, %s3
  $region1: #{tpu_custom_call.1} parent=0
    #allocation3 [shape = 'u8[32768]{0}', space=vmem, size = 0x8000, scoped, tag = 'input window, operand 0, single buffered']
    #allocation4 [shape = 's32[1]{0}', space=sflag, size = 0x4, scoped, tag = 'scoped memory for tpu_custom_call.1']
    #allocation5 [shape = 's32[1]{0}', space=sflag, size = 0x4, scoped, tag = 'scoped memory for tpu_custom_call.1']
    #allocation6 [shape = 'u8[32768]{0}', space=vmem, size = 0x8000, scoped, tag = 'input window, operand 1, single buffered']
    #allocation7 [shape = 's32[1]{0}', space=sflag, size = 0x4, scoped, tag = 'scoped memory for tpu_custom_call.1']
    #allocation8 [shape = 'u8[512]{0}', space=smem, size = 0x200, scoped, tag = 'output window, operand 0, single buffered']
    %7 = vsyncpa [#allocation4], 0
    %8 = vsyncpa [#allocation7], 0
    %9 = vsyncpa [#allocation5], 0
    // Predicated region
    $region2: #{tpu_custom_call.1} parent=1 // pred_check
      _
    $region3: #{tpu_custom_call.1} parent=1 // pred_check_branch
      %11 = sbr.rel (0) target = $region5
    $region4: #{tpu_custom_call.1} parent=1 // pred_region
      %s13 = ssub.s32 1024, 1024
      %14 = vsyncadd [#allocation4], %s13
      %s16 = sshll.u32 [#allocation3], 4
      %s17 = int_to_ptr.vmem [resolvable:$true] %s16
      %19 = dma.hbm_to_vmem [thread:$0]  %s0, 1024, %s17, [#allocation4]
    $region5: #{tpu_custom_call.1} parent=1 // pred_fallthru
      _
    // Predicated region
    $region6: #{tpu_custom_call.1} parent=1 // pred_check
      _
    $region7: #{tpu_custom_call.1} parent=1 // pred_check_branch
      %21 = sbr.rel (0) target = $region9
    $region8: #{tpu_custom_call.1} parent=1 // pred_region
      %s23 = ssub.s32 1024, 1024
      %24 = vsyncadd [#allocation7], %s23
      %s26 = sshll.u32 [#allocation6], 4
      %s27 = int_to_ptr.vmem [resolvable:$true] %s26
      %29 = dma.hbm_to_vmem [thread:$0]  %s1, 1024, %s27, [#allocation7]
    $region9: #{tpu_custom_call.1} parent=1 // pred_fallthru
      _
    // Predicated region
    $region10: #{tpu_custom_call.1} parent=1 // pred_check
      _
    $region11: #{tpu_custom_call.1} parent=1 // pred_check_branch
      %31 = sbr.rel (0) target = $region13
    $region12: #{tpu_custom_call.1} parent=1 // pred_region
      %32 = dma.done [#allocation4], 1024
    $region13: #{tpu_custom_call.1} parent=1 // pred_fallthru
      _
    // Predicated region
    $region14: #{tpu_custom_call.1} parent=1 // pred_check
      _
    $region15: #{tpu_custom_call.1} parent=1 // pred_check_branch
      %34 = sbr.rel (0) target = $region17
    $region16: #{tpu_custom_call.1} parent=1 // pred_region
      %35 = dma.done [#allocation7], 1024
    $region17: #{tpu_custom_call.1} parent=1 // pred_fallthru
      _
    %p36 = scmp.eq.s32.totalorder 0, 0
    // Predicated region
    $region18: #{tpu_custom_call.1} parent=1 // pred_check
      %p37 = pneg %p36
    $region19: #{tpu_custom_call.1} parent=1 // pred_check_branch
      %39 = sbr.rel (%p37) target = $region21
    $region20: #{tpu_custom_call.1} parent=1 // pred_region
      %40 = vst [vmem:[#allocation2] sm:$0xff] 0.0
      %41 = vst [vmem:[#allocation2 + $0x8] sm:$0xff] 0.0
      %42 = vst [vmem:[#allocation2 + $0x10] sm:$0xff] 0.0
      %43 = vst [vmem:[#allocation2 + $0x18] sm:$0xff] 0.0
      %44 = vst [vmem:[#allocation2 + $0x20] sm:$0xff] 0.0
      %45 = vst [vmem:[#allocation2 + $0x28] sm:$0xff] 0.0
      %46 = vst [vmem:[#allocation2 + $0x30] sm:$0xff] 0.0
      %47 = vst [vmem:[#allocation2 + $0x38] sm:$0xff] 0.0
    $region21: #{tpu_custom_call.1} parent=1 // pred_fallthru
      _
    %v48 = vld [vmem:[#allocation3] sm:$0xff]
    %v49 = vld [vmem:[#allocation3 + $0x8] sm:$0xff]
    %v50 = vld [vmem:[#allocation3 + $0x10] sm:$0xff]
    %v51 = vld [vmem:[#allocation3 + $0x18] sm:$0xff]
    %v52 = vld [vmem:[#allocation3 + $0x20] sm:$0xff]
    %v53 = vld [vmem:[#allocation3 + $0x28] sm:$0xff]
    %v54 = vld [vmem:[#allocation3 + $0x30] sm:$0xff]
    %v55 = vld [vmem:[#allocation3 + $0x38] sm:$0xff]
    %v56 = vld [vmem:[#allocation6] sm:$0xff]
    %v57 = vld [vmem:[#allocation6 + $0x8] sm:$0xff]
    %v58 = vld [vmem:[#allocation6 + $0x10] sm:$0xff]
    %v59 = vld [vmem:[#allocation6 + $0x18] sm:$0xff]
    %v60 = vld [vmem:[#allocation6 + $0x20] sm:$0xff]
    %v61 = vld [vmem:[#allocation6 + $0x28] sm:$0xff]
    %v62 = vld [vmem:[#allocation6 + $0x30] sm:$0xff]
    %v63 = vld [vmem:[#allocation6 + $0x38] sm:$0xff]
    %v64 = vsub.f32 %v48, %v56
    %v65 = vsub.f32 %v49, %v57
    %v66 = vsub.f32 %v50, %v58
    %v67 = vsub.f32 %v51, %v59
    %v68 = vsub.f32 %v52, %v60
    %v69 = vsub.f32 %v53, %v61
    %v70 = vsub.f32 %v54, %v62
    %v71 = vsub.f32 %v55, %v63
    %v72 = vmul.f32 %v64, %v64
    %v73 = vmul.f32 %v65, %v65
    %v74 = vmul.f32 %v66, %v66
    %v75 = vmul.f32 %v67, %v67
    %v76 = vmul.f32 %v68, %v68
    %v77 = vmul.f32 %v69, %v69
    %v78 = vmul.f32 %v70, %v70
    %v79 = vmul.f32 %v71, %v71
    %v80 = vld [vmem:[#allocation2] sm:$0xff]
    %v81 = vld [vmem:[#allocation2 + $0x8] sm:$0xff]
    %v82 = vld [vmem:[#allocation2 + $0x10] sm:$0xff]
    %v83 = vld [vmem:[#allocation2 + $0x18] sm:$0xff]
    %v84 = vld [vmem:[#allocation2 + $0x20] sm:$0xff]
    %v85 = vld [vmem:[#allocation2 + $0x28] sm:$0xff]
    %v86 = vld [vmem:[#allocation2 + $0x30] sm:$0xff]
    %v87 = vld [vmem:[#allocation2 + $0x38] sm:$0xff]
    %v88 = vadd.f32 %v72, 0.0
    %v89 = vadd.f32 %v73, 0.0
    %v90 = vadd.f32 %v74, 0.0
    %v91 = vadd.f32 %v75, 0.0
    %v92 = vadd.f32 %v76, 0.0
    %v93 = vadd.f32 %v77, 0.0
    %v94 = vadd.f32 %v78, 0.0
    %v95 = vadd.f32 %v79, 0.0
    %v96 = vadd.f32 %v80, %v88
    %v97 = vadd.f32 %v81, %v89
    %v98 = vadd.f32 %v82, %v90
    %v99 = vadd.f32 %v83, %v91
    %v100 = vadd.f32 %v84, %v92
    %v101 = vadd.f32 %v85, %v93
    %v102 = vadd.f32 %v86, %v94
    %v103 = vadd.f32 %v87, %v95
    %104 = vst [vmem:[#allocation2] sm:$0xff] %v96
    %105 = vst [vmem:[#allocation2 + $0x8] sm:$0xff] %v97
    %106 = vst [vmem:[#allocation2 + $0x10] sm:$0xff] %v98
    %107 = vst [vmem:[#allocation2 + $0x18] sm:$0xff] %v99
    %108 = vst [vmem:[#allocation2 + $0x20] sm:$0xff] %v100
    %109 = vst [vmem:[#allocation2 + $0x28] sm:$0xff] %v101
    %110 = vst [vmem:[#allocation2 + $0x30] sm:$0xff] %v102
    %111 = vst [vmem:[#allocation2 + $0x38] sm:$0xff] %v103
    // Predicated region
    $region22: #{tpu_custom_call.1} parent=1 // pred_check
      %p112 = pneg %p36
    $region23: #{tpu_custom_call.1} parent=1 // pred_check_branch
      %114 = sbr.rel (%p112) target = $region25
    $region24: #{tpu_custom_call.1} parent=1 // pred_region
      %v115 = vld [vmem:[#allocation2] sm:$0xff]
      %v116 = vld [vmem:[#allocation2 + $0x8] sm:$0xff]
      %v117 = vld [vmem:[#allocation2 + $0x10] sm:$0xff]
      %v118 = vld [vmem:[#allocation2 + $0x18] sm:$0xff]
      %v119 = vld [vmem:[#allocation2 + $0x20] sm:$0xff]
      %v120 = vld [vmem:[#allocation2 + $0x28] sm:$0xff]
      %v121 = vld [vmem:[#allocation2 + $0x30] sm:$0xff]
      %v122 = vld [vmem:[#allocation2 + $0x38] sm:$0xff]
      %v123 = vadd.f32 %v115, %v116
      %v124 = vadd.f32 %v123, %v117
      %v125 = vadd.f32 %v124, %v118
      %v126 = vadd.f32 %v125, %v119
      %v127 = vadd.f32 %v126, %v120
      %v128 = vadd.f32 %v127, %v121
      %v129 = vadd.f32 %v128, %v122
      %130 = vadd.xlane.f32.xlu0 %v129
      %v131 = vpop.xlane.xlu0 %130
      %v132 = vrot.slane %v131, 4
      %v133 = vadd.f32 %v131, %v132
      %v134 = vrot.slane %v133, 2
      %v135 = vadd.f32 %v133, %v134
      %v136 = vrot.slane %v135, 1
      %v137 = vadd.f32 %v135, %v136
      %s138 = vtos %v137
      %s139 = smul.f32 %s138, 0.5
      %s140 = scalar_lea.smem [#allocation8], 0
      %141 = sst [smem:[%s140]] %s139
    $region25: #{tpu_custom_call.1} parent=1 // pred_fallthru
      _
    // Predicated region
    $region26: #{tpu_custom_call.1} parent=1 // pred_check
      _
    $region27: #{tpu_custom_call.1} parent=1 // pred_check_branch
      %143 = sbr.rel (0) target = $region29
    $region28: #{tpu_custom_call.1} parent=1 // pred_region
      %s145 = ssub.s32 16, 16
      %146 = vsyncadd [#allocation5], %s145
      %149 = dma.smem_to_hbm [#allocation8], 16, %s2, [#allocation5]
    $region29: #{tpu_custom_call.1} parent=1 // pred_fallthru
      _
    // Predicated region
    $region30: #{tpu_custom_call.1} parent=1 // pred_check
      _
    $region31: #{tpu_custom_call.1} parent=1 // pred_check_branch
      %151 = sbr.rel (0) target = $region33
    $region32: #{tpu_custom_call.1} parent=1 // pred_region
      %152 = dma.done [#allocation5], 16
    $region33: #{tpu_custom_call.1} parent=1 // pred_fallthru
      _
    %153 = sfence
    %154 = vsyncpa [#allocation4], 1
    %155 = vsyncpa [#allocation7], 1
    %156 = vsyncpa [#allocation5], 1

</llo_original>
